<compile_context>
chip_gen: v6e
topology: v6e:2x2x1
jax: 0.10.0
libtpu: 0.0.40
codegen_flags: <defaults>
</compile_context>

<pallas_src>
import math

import jax
import jax.numpy as jnp
from jax.experimental import pallas as pl
from jax.experimental.pallas import tpu as pltpu


def _round_up(x, m):
    return ((x + m - 1) // m) * m


def _make_kernel(scale: float):
    # `scale` is a static Python float (D is static) baked into the body.
    def kernel(x_ref, wt_ref, b_ref, u_ref, o_ref):
        # MXU #1: (tm, dp) @ (dp, Dp) -> (tm, Dp), f32 accumulation.
        s = jnp.dot(x_ref[...], wt_ref[...], preferred_element_type=jnp.float32)
        s = s + b_ref[...]                       # bias pre-cast to f32 on the host
        phi = jnp.cos(s)                         # EUP transcendental, f32
        # MXU #2: (tm, Dp) @ (Dp, tk_n) -> (tm, tk_n), f32 accumulation.
        z = jnp.dot(phi.astype(u_ref.dtype), u_ref[...],
                    preferred_element_type=jnp.float32)
        # Fuse sqrt(2/D) on the narrow K-wide output instead of the D-wide phi.
        o_ref[...] = scale * z
    return kernel


def kernelized_encoder(x, U, w, b, *, tm=256, compute_dtype=None):
    """Pallas TPU implementation of KernelizedEncoder.forward.

    x: (N, d), U: (D, K), w: (D, d), b: (D,)  ->  z: (N, K) float32.
    compute_dtype=jnp.bfloat16 enables the fast bf16-operand / f32-accumulate
    path on v6e/v7x (halves resident VMEM, multiplies MXU rate).
    """
    x = jnp.asarray(x)
    U = jnp.asarray(U)
    w = jnp.asarray(w)
    b = jnp.asarray(b)

    dtype = U.dtype if compute_dtype is None else jnp.zeros((), compute_dtype).dtype
    itemsize = dtype.itemsize

    N, d = x.shape
    D, K = U.shape
    assert w.shape == (D, d) and b.shape[-1] == D

    scale = float(math.sqrt(2.0 / D))            # static python float

    # Lane-dense padded extents (zeros are sliced off / contribute nothing).
    dp = _round_up(max(d, 128), 128)
    Dp = _round_up(max(D, 128), 128)
    Kp0 = _round_up(max(K, 128), 128)

    # Generation-aware VMEM budget: ~100 MiB (v5e/v6e, 128 MiB physical),
    # ~56 MiB (v7x, 64 MiB physical — leave headroom for Mosaic scratch).
    try:
        vmem_cap = int(pltpu.get_tpu_info().vmem_capacity_bytes)
    except Exception:
        vmem_cap = 64 * 1024 * 1024
    headroom = (28 << 20) if vmem_cap >= (96 << 20) else (8 << 20)
    budget = max(vmem_cap - headroom, 32 << 20)

    kernel = _make_kernel(scale)
    tm_req = int(tm)

    def attempt(single_buffer_residents, x_bufs_req):
        res_bufs = 1 if single_buffer_residents else 2

        # ---- tile selection: keep tm MXU-native, tile K before shrinking tm ----
        tm_ = max(8, min(tm_req, _round_up(N, 8)))
        if tm_ > 256 and -(-N // tm_) == 1 and N > 256:
            # v7x has 2 TensorCores: keep >=2 grid points along N when N is large.
            tm_ = max(256, _round_up(-(-N // 2), 8))
        tk_n = Kp0
        x_bufs = x_bufs_req

        def footprint(tm__, tkn__, xb):
            ub = res_bufs if tkn__ >= Kp0 else 2
            return (res_bufs * (dp * Dp * itemsize + Dp * 4)   # w^T + f32 bias
                    + ub * Dp * tkn__ * itemsize               # U tile(s)
                    + xb * tm__ * dp * itemsize                # streamed x tiles
                    + 2 * tm__ * tkn__ * 4)                    # f32 output tiles

        while tk_n > 128 and footprint(tm_, tk_n, x_bufs) > budget:
            tk_n = max(128, _round_up(tk_n // 2, 128))
        if x_bufs > 2 and footprint(tm_, tk_n, x_bufs) > budget:
            x_bufs = 2
        while tm_ > 128 and footprint(tm_, tk_n, x_bufs) > budget:
            tm_ = max(128, _round_up(tm_ // 2, 8))
        # TODO(synk): if the (dp, Dp) w^T resident alone exceeds the VMEM budget,
        # add an "arbitrary" D-reduction grid axis with a VMEM f32 accumulator.

        Kp = _round_up(Kp0, tk_n)
        Np = _round_up(N, tm_)
        vmem_needed = footprint(tm_, tk_n, x_bufs)
        vmem_limit = int(min(max(vmem_cap - (2 << 20), 32 << 20),
                             max(32 << 20,
                                 _round_up(vmem_needed + (8 << 20), 1 << 20))))

        # ---- host-side zero-padded operands (bias pre-cast to f32) ----
        x_p = jnp.zeros((Np, dp), dtype).at[:N, :d].set(x.astype(dtype))
        w_t = jnp.zeros((dp, Dp), dtype).at[:d, :D].set(w.T.astype(dtype))
        b2 = jnp.zeros((1, Dp), jnp.float32).at[:, :D].set(
            b.reshape(1, D).astype(jnp.float32))
        U_p = jnp.zeros((Dp, Kp), dtype).at[:D, :K].set(U.astype(dtype))

        grid = (Np // tm_, Kp // tk_n)
        u_bufs = 1 if (tk_n == Kp and single_buffer_residents) else 2

        def spec(shape, index_map, bufs):
            if single_buffer_residents:
                return pl.BlockSpec(shape, index_map,
                                    pipeline_mode=pl.Buffered(bufs))
            return pl.BlockSpec(shape, index_map)

        in_specs = [
            spec((tm_, dp), lambda i, j: (i, 0), x_bufs),    # streamed x row tile
            spec((dp, Dp), lambda i, j: (0, 0), 1),          # resident w^T
            spec((1, Dp), lambda i, j: (0, 0), 1),           # resident f32 bias
            spec((Dp, tk_n), lambda i, j: (0, j), u_bufs),   # U (resident / K-tiled)
        ]
        out_spec = pl.BlockSpec((tm_, tk_n), lambda i, j: (i, j))

        cost = pl.CostEstimate(
            flops=int(2 * Np * (dp * Dp + Dp * Kp)),
            transcendentals=int(Np * Dp),
            bytes_accessed=int((Np * dp + dp * Dp + Dp * Kp) * itemsize
                               + Dp * 4 + Np * Kp * 4))

        call = pl.pallas_call(
            kernel,
            out_shape=jax.ShapeDtypeStruct((Np, Kp), jnp.float32),
            grid_spec=pltpu.PrefetchScalarGridSpec(
                num_scalar_prefetch=0,
                grid=grid,
                in_specs=in_specs,
                out_specs=out_spec,
            ),
            compiler_params=pltpu.CompilerParams(
                dimension_semantics=("parallel", "parallel"),
                vmem_limit_bytes=vmem_limit),
            cost_estimate=cost,
        )
        return call(x_p, w_t, b2, U_p)

    try:
        out = attempt(single_buffer_residents=True, x_bufs_req=3)
    except Exception:
        # VMEM-safe fallback for stacks without BlockSpec(pipeline_mode=...):
        # default double-buffering everywhere, with the footprint re-derived
        # for doubled residents before tile selection.
        out = attempt(single_buffer_residents=False, x_bufs_req=2)

    return out[:N, :K]


def reference(x, U, w, b):
    dtype = U.dtype
    x = x.astype(dtype)
    scale = math.sqrt(2.0 / w.shape[0])
    phi = scale * jnp.cos(
        jnp.dot(x, w.T.astype(dtype), precision=jax.lax.Precision.HIGHEST)
        + b.astype(dtype))
    return jnp.dot(phi, U, precision=jax.lax.Precision.HIGHEST).astype(jnp.float32)


if __name__ == "__main__":
    key = jax.random.PRNGKey(0)
    k1, k2, k3, k4 = jax.random.split(key, 4)

    # Shapes consistent with the module: x (N, d), w (D, d), b (D,), U (D, K).
    N, d, D, K = 16, 32, 128, 32
    dtype = jnp.float32

    x = jax.random.normal(k1, (N, d), dtype=dtype)
    U = jax.random.normal(k2, (D, K), dtype=dtype) * 0.1
    w = jax.random.normal(k3, (D, d), dtype=dtype)
    b = jax.random.uniform(k4, (D,), dtype=dtype, minval=0.0,
                           maxval=2.0 * math.pi)

    z = jax.block_until_ready(kernelized_encoder(x, U, w, b))
    z_ref = reference(x, U, w, b)
    assert z.shape == (N, K) and z.dtype == jnp.float32
    assert jnp.allclose(z, z_ref, atol=2e-4, rtol=2e-4), "f32 path mismatch"

    # Optional bf16 fast path (v6e/v7x MXU): bf16 operands, f32 accumulation.
    z_bf16 = jax.block_until_ready(
        kernelized_encoder(x, U, w, b, compute_dtype=jnp.bfloat16))
    assert z_bf16.shape == (N, K) and z_bf16.dtype == jnp.float32
    assert jnp.allclose(z_bf16, z_ref, atol=5e-2, rtol=5e-2), "bf16 path mismatch"

    # Second (multi-tile / padded-dim) shape: exercises d, D, K, N padding paths.
    k5, k6, k7, k8 = jax.random.split(jax.random.PRNGKey(0), 4)
    N2, d2, D2, K2 = 260, 48, 192, 160
    x2 = jax.random.normal(k5, (N2, d2), dtype=dtype)
    U2 = jax.random.normal(k6, (D2, K2), dtype=dtype) * 0.1
    w2 = jax.random.normal(k7, (D2, d2), dtype=dtype)
    b2 = jax.random.uniform(k8, (D2,), dtype=dtype, minval=0.0,
                            maxval=2.0 * math.pi)
    z2 = jax.block_until_ready(kernelized_encoder(x2, U2, w2, b2))
    z2_ref = reference(x2, U2, w2, b2)
    assert z2.shape == (N2, K2) and z2.dtype == jnp.float32
    assert jnp.allclose(z2, z2_ref, atol=2e-4, rtol=2e-4), "padded path mismatch"

    print("KERNEL_OK")
</pallas_src>

<mosaic_0001>
module attributes {stable_mosaic.version = 11 : i64} {
  func.func @kernel(%arg0: i32, %arg1: i32, %arg2: memref<16x128xf32, #tpu.memory_space<vmem>>, %arg3: memref<128x128xf32, #tpu.memory_space<vmem>>, %arg4: memref<1x128xf32, #tpu.memory_space<vmem>>, %arg5: memref<128x128xf32, #tpu.memory_space<vmem>>, %arg6: memref<16x128xf32, #tpu.memory_space<vmem>>) attributes {dimension_semantics = [#tpu.dimension_semantics<parallel>, #tpu.dimension_semantics<parallel>], iteration_bounds = array<i64: 1, 1>, scalar_prefetch = 0 : i64, scratch_operands = 0 : i64, tpu.core_type = #tpu.core_type<tc>, window_params = [{transform_indices = @transform_0, window_bounds = array<i64: 16, 128>}, {pipeline_mode = #tpu.pipeline_mode<synchronous>, transform_indices = @transform_1, window_bounds = array<i64: 128, 128>}, {pipeline_mode = #tpu.pipeline_mode<synchronous>, transform_indices = @transform_2, window_bounds = array<i64: 1, 128>}, {transform_indices = @transform_3, window_bounds = array<i64: 128, 128>}, {transform_indices = @transform_4, window_bounds = array<i64: 16, 128>}]} {
    %c0 = arith.constant 0 : index
    %c0_0 = arith.constant 0 : index
    %0 = vector.load %arg2[%c0, %c0_0] : memref<16x128xf32, #tpu.memory_space<vmem>>, vector<16x128xf32>
    %c0_1 = arith.constant 0 : index
    %c0_2 = arith.constant 0 : index
    %1 = vector.load %arg3[%c0_1, %c0_2] : memref<128x128xf32, #tpu.memory_space<vmem>>, vector<128x128xf32>
    %cst = arith.constant dense<0.000000e+00> : vector<16x128xf32>
    %2 = tpu.matmul %0, %1, %cst {dimension_numbers = #tpu.dot_dimension_numbers<[1], [0], [0], [1], [0, 0, 1, 1], [], []>} : vector<16x128xf32>, vector<128x128xf32>, vector<16x128xf32> -> vector<16x128xf32>
    %c0_3 = arith.constant 0 : index
    %c0_4 = arith.constant 0 : index
    %3 = vector.load %arg4[%c0_3, %c0_4] : memref<1x128xf32, #tpu.memory_space<vmem>>, vector<1x128xf32>
    %4 = vector.broadcast %3 : vector<1x128xf32> to vector<16x128xf32>
    %5 = arith.addf %2, %4 : vector<16x128xf32>
    %6 = math.cos %5 : vector<16x128xf32>
    %c0_5 = arith.constant 0 : index
    %c0_6 = arith.constant 0 : index
    %7 = vector.load %arg5[%c0_5, %c0_6] : memref<128x128xf32, #tpu.memory_space<vmem>>, vector<128x128xf32>
    %cst_7 = arith.constant dense<0.000000e+00> : vector<16x128xf32>
    %8 = tpu.matmul %6, %7, %cst_7 {dimension_numbers = #tpu.dot_dimension_numbers<[1], [0], [0], [1], [0, 0, 1, 1], [], []>} : vector<16x128xf32>, vector<128x128xf32>, vector<16x128xf32> -> vector<16x128xf32>
    %cst_8 = arith.constant 1.250000e-01 : f32
    %9 = vector.broadcast %cst_8 : f32 to vector<16x128xf32>
    %10 = arith.mulf %9, %8 : vector<16x128xf32>
    %c0_9 = arith.constant 0 : index
    %c0_10 = arith.constant 0 : index
    %11 = vector.load %arg6[%c0_9, %c0_10] : memref<16x128xf32, #tpu.memory_space<vmem>>, vector<16x128xf32>
    tpu.vector_store %arg6[%c0_9, %c0_10], %10 {strides = array<i32>} : memref<16x128xf32, #tpu.memory_space<vmem>>, vector<16x128xf32>,
    return
  }
  func.func @transform_0(%arg0: i32, %arg1: i32) -> (i32, i32) {
    %c0_i32 = arith.constant 0 : i32
    %c0_i32_0 = arith.constant 0 : i32
    return %arg0, %c0_i32 : i32, i32
  }
  func.func @transform_1(%arg0: i32, %arg1: i32) -> (i32, i32) {
    %c0_i32 = arith.constant 0 : i32
    %c0_i32_0 = arith.constant 0 : i32
    %c0_i32_1 = arith.constant 0 : i32
    return %c0_i32, %c0_i32_0 : i32, i32
  }
  func.func @transform_2(%arg0: i32, %arg1: i32) -> (i32, i32) {
    %c0_i32 = arith.constant 0 : i32
    %c0_i32_0 = arith.constant 0 : i32
    %c0_i32_1 = arith.constant 0 : i32
    return %c0_i32, %c0_i32_0 : i32, i32
  }
  func.func @transform_3(%arg0: i32, %arg1: i32) -> (i32, i32) {
    %c0_i32 = arith.constant 0 : i32
    %c0_i32_0 = arith.constant 0 : i32
    return %c0_i32, %arg1 : i32, i32
  }
  func.func @transform_4(%arg0: i32, %arg1: i32) -> (i32, i32) {
    %c0_i32 = arith.constant 0 : i32
    return %arg0, %arg1 : i32, i32
  }
}

</mosaic_0001>

<llo_original>
// kernel: tpu_custom_call.1
$region0: #{tpu_custom_call.1}
  #allocation0 [shape = 'u32[]', space=smem, size = 0x4, offset = 0x4, fixed_abs, tag = 'smem constant byte address 0x4 - core index']
  #allocation1 [shape = 'u32[144,128]{1,0:T(1,128)}', space=vmem, size = 0x12000, scoped, tag = 'internal scratch']
  %s0 = inlined_call_operand.hbm [shape: f32[16,128], index: 0, kind: input, shape index: {}]
  %s1 = inlined_call_operand.hbm [shape: f32[128,128], index: 1, kind: input, shape index: {}]
  %s2 = inlined_call_operand.vmem [shape: f32[1,128], index: 2, kind: input, shape index: {}]
  %s3 = inlined_call_operand.hbm [shape: f32[128,128], index: 3, kind: input, shape index: {}]
  %s4 = inlined_call_operand.hbm [shape: f32[16,128], index: 4, kind: output, shape index: {}]
  %s5 = sld [smem:[#allocation0]]
  $region38: #{tpu_custom_call.1} parent=0
    _
  %s7 = ssub.s32 1, %s5
  %s8 = scalar_select 0, %s7, %s5
  $region1: #{tpu_custom_call.1} parent=0
    #allocation2 [shape = 'u8[8192]{0}', space=vmem, size = 0x2000, scoped, tag = 'input window, operand 0, single buffered']
    #allocation3 [shape = 's32[1]{0}', space=sflag, size = 0x4, scoped, tag = 'scoped memory for tpu_custom_call.1']
    #allocation4 [shape = 's32[1]{0}', space=sflag, size = 0x4, scoped, tag = 'scoped memory for tpu_custom_call.1']
    #allocation5 [shape = 'u8[65536]{0}', space=vmem, size = 0x10000, scoped, tag = 'input window, operand 1, single buffered']
    #allocation6 [shape = 's32[1]{0}', space=sflag, size = 0x4, scoped, tag = 'scoped memory for tpu_custom_call.1']
    #allocation7 [shape = 'u8[65536]{0}', space=vmem, size = 0x10000, scoped, tag = 'input window, operand 3, single buffered']
    #allocation8 [shape = 'u8[8192]{0}', space=vmem, size = 0x2000, scoped, tag = 'output window, operand 0, single buffered']
    %9 = vsyncpa [#allocation3], 0
    %10 = vsyncpa [#allocation6], 0
    %11 = vsyncpa [#allocation4], 0
    // Predicated region
    $region2: #{tpu_custom_call.1} parent=1 // pred_check
      _
    $region3: #{tpu_custom_call.1} parent=1 // pred_check_branch
      %13 = sbr.rel (0) target = $region5
    $region4: #{tpu_custom_call.1} parent=1 // pred_region
      %s15 = ssub.s32 256, 256
      %16 = vsyncadd [#allocation3], %s15
      %s17 = sshll.u32 [#allocation2], 4
      %s18 = int_to_ptr.vmem [resolvable:$true] %s17
      %23 = dma.hbm_to_vmem [thread:$0]  %s0, 256, %s18, [#allocation3], 128, 128, 8
    $region5: #{tpu_custom_call.1} parent=1 // pred_fallthru
      _
    // Predicated region
    $region6: #{tpu_custom_call.1} parent=1 // pred_check
      _
    $region7: #{tpu_custom_call.1} parent=1 // pred_check_branch
      %25 = sbr.rel (0) target = $region9
    $region8: #{tpu_custom_call.1} parent=1 // pred_region
      %s27 = ssub.s32 2048, 2048
      %28 = vsyncadd [#allocation6], %s27
      %s29 = sshll.u32 [#allocation5], 4
      %s30 = int_to_ptr.vmem [resolvable:$true] %s29
      %35 = dma.hbm_to_vmem [thread:$0]  %s1, 2048, %s30, [#allocation6], 128, 128, 8
    $region9: #{tpu_custom_call.1} parent=1 // pred_fallthru
      _
    // Predicated region
    $region10: #{tpu_custom_call.1} parent=1 // pred_check
      _
    $region11: #{tpu_custom_call.1} parent=1 // pred_check_branch
      %37 = sbr.rel (0) target = $region13
    $region12: #{tpu_custom_call.1} parent=1 // pred_region
      _
    $region13: #{tpu_custom_call.1} parent=1 // pred_fallthru
      _
    // Predicated region
    $region14: #{tpu_custom_call.1} parent=1 // pred_check
      _
    $region15: #{tpu_custom_call.1} parent=1 // pred_check_branch
      %39 = sbr.rel (0) target = $region17
    $region16: #{tpu_custom_call.1} parent=1 // pred_region
      %s41 = ssub.s32 2048, 2048
      %42 = vsyncadd [#allocation6], %s41
      %s43 = sshll.u32 [#allocation7], 4
      %s44 = int_to_ptr.vmem [resolvable:$true] %s43
      %49 = dma.hbm_to_vmem [thread:$0]  %s3, 2048, %s44, [#allocation6], 128, 128, 8
    $region17: #{tpu_custom_call.1} parent=1 // pred_fallthru
      _
    // Predicated region
    $region18: #{tpu_custom_call.1} parent=1 // pred_check
      _
    $region19: #{tpu_custom_call.1} parent=1 // pred_check_branch
      %51 = sbr.rel (0) target = $region21
    $region20: #{tpu_custom_call.1} parent=1 // pred_region
      %52 = dma.done [#allocation3], 256
    $region21: #{tpu_custom_call.1} parent=1 // pred_fallthru
      _
    // Predicated region
    $region22: #{tpu_custom_call.1} parent=1 // pred_check
      _
    $region23: #{tpu_custom_call.1} parent=1 // pred_check_branch
      %54 = sbr.rel (0) target = $region25
    $region24: #{tpu_custom_call.1} parent=1 // pred_region
      %55 = dma.done [#allocation6], 2048
    $region25: #{tpu_custom_call.1} parent=1 // pred_fallthru
      _
    // Predicated region
    $region26: #{tpu_custom_call.1} parent=1 // pred_check
      _
    $region27: #{tpu_custom_call.1} parent=1 // pred_check_branch
      %57 = sbr.rel (0) target = $region29
    $region28: #{tpu_custom_call.1} parent=1 // pred_region
      %58 = dma.done [#allocation6], 2048
    $region29: #{tpu_custom_call.1} parent=1 // pred_fallthru
      _
    %v59 = vld [vmem:[#allocation2] sm:$0xff]
    %v60 = vld [vmem:[#allocation2 + $0x8] sm:$0xff]
    %v61 = vld [vmem:[#allocation5] sm:$0xff]
    %v62 = vld [vmem:[#allocation5 + $0x8] sm:$0xff]
    %v63 = vld [vmem:[#allocation5 + $0x10] sm:$0xff]
    %v64 = vld [vmem:[#allocation5 + $0x18] sm:$0xff]
    %v65 = vld [vmem:[#allocation5 + $0x20] sm:$0xff]
    %v66 = vld [vmem:[#allocation5 + $0x28] sm:$0xff]
    %v67 = vld [vmem:[#allocation5 + $0x30] sm:$0xff]
    %v68 = vld [vmem:[#allocation5 + $0x38] sm:$0xff]
    %v69 = vld [vmem:[#allocation5 + $0x40] sm:$0xff]
    %v70 = vld [vmem:[#allocation5 + $0x48] sm:$0xff]
    %v71 = vld [vmem:[#allocation5 + $0x50] sm:$0xff]
    %v72 = vld [vmem:[#allocation5 + $0x58] sm:$0xff]
    %v73 = vld [vmem:[#allocation5 + $0x60] sm:$0xff]
    %v74 = vld [vmem:[#allocation5 + $0x68] sm:$0xff]
    %v75 = vld [vmem:[#allocation5 + $0x70] sm:$0xff]
    %v76 = vld [vmem:[#allocation5 + $0x78] sm:$0xff]
    %v77 = vld [vmem:[%s2] sm:$0x1]
    %v79 = vlaneseq
    %v80 = vshrl.u32 %v79, 7
    %v81 = vsub.s32 0, %v80
    %v82 = vrot.slane %v77, %v81
    %84 = vmatprep.subr.mxu0 0.0
    %85 = vmatpush1.msra.mxu0 %v76
    %86 = vmatprep.subr.mxu0 0.0
    %87 = vmatpush1.msra.mxu0 %v75
    %88 = vmatprep.subr.mxu0 0.0
    %89 = vmatpush1.msra.mxu0 %v74
    %90 = vmatprep.subr.mxu0 0.0
    %91 = vmatpush1.msra.mxu0 %v73
    %92 = vmatprep.subr.mxu0 0.0
    %93 = vmatpush1.msra.mxu0 %v72
    %94 = vmatprep.subr.mxu0 0.0
    %95 = vmatpush1.msra.mxu0 %v71
    %96 = vmatprep.subr.mxu0 0.0
    %97 = vmatpush1.msra.mxu0 %v70
    %98 = vmatprep.subr.mxu0 0.0
    %99 = vmatpush1.msra.mxu0 %v69
    %100 = vmatprep.subr.mxu0 0.0
    %101 = vmatpush1.msra.mxu0 %v68
    %102 = vmatprep.subr.mxu0 0.0
    %103 = vmatpush1.msra.mxu0 %v67
    %104 = vmatprep.subr.mxu0 0.0
    %105 = vmatpush1.msra.mxu0 %v66
    %106 = vmatprep.subr.mxu0 0.0
    %107 = vmatpush1.msra.mxu0 %v65
    %108 = vmatprep.subr.mxu0 0.0
    %109 = vmatpush1.msra.mxu0 %v64
    %110 = vmatprep.subr.mxu0 0.0
    %111 = vmatpush1.msra.mxu0 %v63
    %112 = vmatprep.subr.mxu0 0.0
    %113 = vmatpush1.msra.mxu0 %v62
    %114 = vmatprep.subr.mxu0 0.0
    %115 = vmatpush1.msra.mxu0 %v61
    %116 = vmatprep.subr.mxu0 0.0
    %117 = vmatpush2.msra.mxu0 0.0
    %118 = vmatprep.subr.mxu0 0.0
    %119 = vmatpush2.msra.mxu0 0.0
    %120 = vmatprep.subr.mxu0 0.0
    %121 = vmatpush2.msra.mxu0 0.0
    %122 = vmatprep.subr.mxu0 0.0
    %123 = vmatpush2.msra.mxu0 0.0
    %124 = vmatprep.subr.mxu0 0.0
    %125 = vmatpush2.msra.mxu0 0.0
    %126 = vmatprep.subr.mxu0 0.0
    %127 = vmatpush2.msra.mxu0 0.0
    %128 = vmatprep.subr.mxu0 0.0
    %129 = vmatpush2.msra.mxu0 0.0
    %130 = vmatprep.subr.mxu0 0.0
    %131 = vmatpush2.msra.mxu0 0.0
    %132 = vmatprep.subr.mxu0 0.0
    %133 = vmatpush2.msra.mxu0 0.0
    %134 = vmatprep.subr.mxu0 0.0
    %135 = vmatpush2.msra.mxu0 0.0
    %136 = vmatprep.subr.mxu0 0.0
    %137 = vmatpush2.msra.mxu0 0.0
    %138 = vmatprep.subr.mxu0 0.0
    %139 = vmatpush2.msra.mxu0 0.0
    %140 = vmatprep.subr.mxu0 0.0
    %141 = vmatpush2.msra.mxu0 0.0
    %142 = vmatprep.subr.mxu0 0.0
    %143 = vmatpush2.msra.mxu0 0.0
    %144 = vmatprep.subr.mxu0 0.0
    %145 = vmatpush2.msra.mxu0 0.0
    %146 = vmatprep.subr.mxu0 0.0
    %147 = vmatpush2.msra.mxu0 0.0
    %148 = vmatprep.mubr.f32.mxu0 0.0
    %149 = vmatmul.mubr.f32.gmra.mxu0 %v59
    %v150 = vpop.f32.mrf.mxu0
    %v151 = vadd.f32 %v82, %v150
    %v152 = vpop.f32.mrf.mxu0
    %153 = vmatprep.mubr.f32.mxu0 0.0
    %154 = vmatmul.mubr.f32.gmra.mxu0 %v60
    %v155 = vpop.f32.mrf.mxu0
    %v156 = vadd.f32 %v82, %v155
    %v157 = vpop.f32.mrf.mxu0
    %158 = vdwg.mxu0
    %v159 = vand.u32 2147483647, %v151
    %vm160 = vcmp.le.f32.partialorder %v159, 0.7853982
    %vm161 = vcmp.lt.s32.totalorder %v151, 0
    %v162 = vand.u32 %v151, 2139095040
    %v163 = vshrl.u32 %v162, 23
    %v164 = vsub.s32 %v163, 127
    %v165 = vand.u32 2147483647, %v151
    %v166 = vand.u32 %v165, 8388607
    %v167 = vor.u32 %v166, 8388608
    %v168 = vsub.s32 0, %v167
    %v169 = vadd.s32 %v164, 1
    %vm170 = vcmp.gt.s32.totalorder %v169, 0
    %v171 = vsel %vm170, %v169, 0
    %v172 = vshrl.u32 %v171, 5
    %v173 = vand.u32 %v171, 31
    %v174 = vsub.s32 32, %v173
    %v175 = vshrl.u32 683565275, %v174
    %v176 = vshll.u32 683565275, %v173
    %v177 = vshrl.u32 2475754826, %v174
    %v178 = vor.u32 %v176, %v177
    %v179 = vshll.u32 2475754826, %v173
    %v180 = vshrl.u32 2131351028, %v174
    %v181 = vor.u32 %v179, %v180
    %v182 = vshll.u32 2131351028, %v173
    %v183 = vshrl.u32 2102212464, %v174
    %v184 = vor.u32 %v182, %v183
    %v185 = vshll.u32 2102212464, %v173
    %v186 = vshrl.u32 920167782, %v174
    %v187 = vor.u32 %v185, %v186
    %v188 = vshll.u32 920167782, %v173
    %v189 = vshrl.u32 1326507024, %v174
    %v190 = vor.u32 %v188, %v189
    %vm191 = vcmp.lt.s32.totalorder %v172, 1
    %vm192 = vcmp.lt.s32.totalorder %v172, 2
    %vm193 = vcmp.lt.s32.totalorder %v172, 3
    %vm194 = vcmp.lt.s32.totalorder %v172, 4
    %v195 = vsel %vm191, %v175, %v178
    %v196 = vsel %vm194, %v184, 2102212464
    %v197 = vsel %vm193, %v181, %v196
    %v198 = vsel %vm192, %v195, %v197
    %v199 = vsel %vm191, %v178, %v181
    %v200 = vsel %vm194, %v187, 920167782
    %v201 = vsel %vm193, %v184, %v200
    %v202 = vsel %vm192, %v199, %v201
    %v203 = vsel %vm191, %v181, %v184
    %v204 = vsel %vm194, %v190, 1326507024
    %v205 = vsel %vm193, %v187, %v204
    %v206 = vsel %vm192, %v203, %v205
    %v207 = vshll.u32 %v167, 8
    %v208 = vmul.u32.u64.compose %v207, %v206
    %v209 = vextract.low.u32 %v208
    %v210 = vextract.high.u32 %v208
    %v211 = vmul.u32.u64.compose %v207, %v202
    %v212 = vextract.low.u32 %v211
    %v213 = vextract.high.u32 %v211
    %v214 = vmul.u32 %v207, %v198
    %v215 = vadd.s32 %v210, %v212
    %vm216 = vc.u32 %v210, %v212
    %v217 = vadd.s32 %v213, 1
    %v218 = vsel %vm216, %v217, %v213
    %v219 = vadd.s32 %v214, %v218
    %v220 = vadd.s32 %v219, 536870912
    %v221 = vshrl.u32 %v220, 30
    %v222 = vshll.u32 %v221, 30
    %v223 = vsub.s32 %v219, %v222
    %vm224 = vcmp.lt.s32.totalorder %v223, 0
    %v225 = vsub.s32 0, %v223
    %v226 = vsel %vm224, %v225, %v223
    %v227 = vclz %v226
    %v228 = vsub.s32 %v227, 2
    %vm229 = vcmp.gt.s32.totalorder 0, %v228
    %v230 = vsel %vm229, 0, %v228
    %v231 = vsub.s32 32, %v230
    %v232 = vshll.u32 %v223, %v230
    %v233 = vshrl.u32 %v215, %v231
    %v234 = vor.u32 %v232, %v233
    %v235 = vsub.s32 4294967266, %v230
    %v236 = vadd.s32 %v235, 127
    %v237 = vshll.u32 %v236, 23
    %v238 = vor.u32 4788187, %v237
    %v239 = vand.u32 2147483647, %v238
    %v241 = vcvt.s32.f32 %v234
    %v242 = vmul.f32 %v241, %v239
    %v243 = vxor.u32 %v242, 2147483648
    %v244 = vsel %vm161, %v243, %v242
    %v245 = vsub.s32 4, %v221
    %v246 = vsel %vm161, %v245, %v221
    %v247 = vsel %vm160, %v151, %v244
    %v248 = vsel %vm160, 0, %v246
    %v249 = vcosq.f32.pop %v247
    %v250 = vsinq.f32.pop %v247
    %vm251 = vweird.f32 %v151
    %v252 = vand.u32 %v248, 3
    %vm253 = vcmp.lt.s32.totalorder %v252, 2
    %vm254 = vcmp.eq.s32.totalorder %v252, 0
    %v255 = vxor.u32 %v250, 2147483648
    %v256 = vsel %vm254, %v249, %v255
    %vm257 = vcmp.eq.s32.totalorder %v252, 2
    %v258 = vxor.u32 %v249, 2147483648
    %v259 = vsel %vm257, %v258, %v250
    %v260 = vsel %vm253, %v256, %v259
    %v261 = vsel %vm251, nan, %v260
    %v262 = vand.u32 2147483647, %v156
    %vm263 = vcmp.le.f32.partialorder %v262, 0.7853982
    %vm264 = vcmp.lt.s32.totalorder %v156, 0
    %v265 = vand.u32 %v156, 2139095040
    %v266 = vshrl.u32 %v265, 23
    %v267 = vsub.s32 %v266, 127
    %v268 = vand.u32 2147483647, %v156
    %v269 = vand.u32 %v268, 8388607
    %v270 = vor.u32 %v269, 8388608
    %v271 = vsub.s32 0, %v270
    %v272 = vadd.s32 %v267, 1
    %vm273 = vcmp.gt.s32.totalorder %v272, 0
    %v274 = vsel %vm273, %v272, 0
    %v275 = vshrl.u32 %v274, 5
    %v276 = vand.u32 %v274, 31
    %v277 = vsub.s32 32, %v276
    %v278 = vshrl.u32 683565275, %v277
    %v279 = vshll.u32 683565275, %v276
    %v280 = vshrl.u32 2475754826, %v277
    %v281 = vor.u32 %v279, %v280
    %v282 = vshll.u32 2475754826, %v276
    %v283 = vshrl.u32 2131351028, %v277
    %v284 = vor.u32 %v282, %v283
    %v285 = vshll.u32 2131351028, %v276
    %v286 = vshrl.u32 2102212464, %v277
    %v287 = vor.u32 %v285, %v286
    %v288 = vshll.u32 2102212464, %v276
    %v289 = vshrl.u32 920167782, %v277
    %v290 = vor.u32 %v288, %v289
    %v291 = vshll.u32 920167782, %v276
    %v292 = vshrl.u32 1326507024, %v277
    %v293 = vor.u32 %v291, %v292
    %vm294 = vcmp.lt.s32.totalorder %v275, 1
    %vm295 = vcmp.lt.s32.totalorder %v275, 2
    %vm296 = vcmp.lt.s32.totalorder %v275, 3
    %vm297 = vcmp.lt.s32.totalorder %v275, 4
    %v298 = vsel %vm294, %v278, %v281
    %v299 = vsel %vm297, %v287, 2102212464
    %v300 = vsel %vm296, %v284, %v299
    %v301 = vsel %vm295, %v298, %v300
    %v302 = vsel %vm294, %v281, %v284
    %v303 = vsel %vm297, %v290, 920167782
    %v304 = vsel %vm296, %v287, %v303
    %v305 = vsel %vm295, %v302, %v304
    %v306 = vsel %vm294, %v284, %v287
    %v307 = vsel %vm297, %v293, 1326507024
    %v308 = vsel %vm296, %v290, %v307
    %v309 = vsel %vm295, %v306, %v308
    %v310 = vshll.u32 %v270, 8
    %v311 = vmul.u32.u64.compose %v310, %v309
    %v312 = vextract.low.u32 %v311
    %v313 = vextract.high.u32 %v311
    %v314 = vmul.u32.u64.compose %v310, %v305
    %v315 = vextract.low.u32 %v314
    %v316 = vextract.high.u32 %v314
    %v317 = vmul.u32 %v310, %v301
    %v318 = vadd.s32 %v313, %v315
    %vm319 = vc.u32 %v313, %v315
    %v320 = vadd.s32 %v316, 1
    %v321 = vsel %vm319, %v320, %v316
    %v322 = vadd.s32 %v317, %v321
    %v323 = vadd.s32 %v322, 536870912
    %v324 = vshrl.u32 %v323, 30
    %v325 = vshll.u32 %v324, 30
    %v326 = vsub.s32 %v322, %v325
    %vm327 = vcmp.lt.s32.totalorder %v326, 0
    %v328 = vsub.s32 0, %v326
    %v329 = vsel %vm327, %v328, %v326
    %v330 = vclz %v329
    %v331 = vsub.s32 %v330, 2
    %vm332 = vcmp.gt.s32.totalorder 0, %v331
    %v333 = vsel %vm332, 0, %v331
    %v334 = vsub.s32 32, %v333
    %v335 = vshll.u32 %v326, %v333
    %v336 = vshrl.u32 %v318, %v334
    %v337 = vor.u32 %v335, %v336
    %v338 = vsub.s32 4294967266, %v333
    %v339 = vadd.s32 %v338, 127
    %v340 = vshll.u32 %v339, 23
    %v341 = vor.u32 4788187, %v340
    %v342 = vand.u32 2147483647, %v341
    %v344 = vcvt.s32.f32 %v337
    %v345 = vmul.f32 %v344, %v342
    %v346 = vxor.u32 %v345, 2147483648
    %v347 = vsel %vm264, %v346, %v345
    %v348 = vsub.s32 4, %v324
    %v349 = vsel %vm264, %v348, %v324
    %v350 = vsel %vm263, %v156, %v347
    %v351 = vsel %vm263, 0, %v349
    %v352 = vcosq.f32.pop %v350
    %v353 = vsinq.f32.pop %v350
    %vm354 = vweird.f32 %v156
    %v355 = vand.u32 %v351, 3
    %vm356 = vcmp.lt.s32.totalorder %v355, 2
    %vm357 = vcmp.eq.s32.totalorder %v355, 0
    %v358 = vxor.u32 %v353, 2147483648
    %v359 = vsel %vm357, %v352, %v358
    %vm360 = vcmp.eq.s32.totalorder %v355, 2
    %v361 = vxor.u32 %v352, 2147483648
    %v362 = vsel %vm360, %v361, %v353
    %v363 = vsel %vm356, %v359, %v362
    %v364 = vsel %vm354, nan, %v363
    %v365 = vld [vmem:[#allocation7] sm:$0xff]
    %v366 = vld [vmem:[#allocation7 + $0x8] sm:$0xff]
    %v367 = vld [vmem:[#allocation7 + $0x10] sm:$0xff]
    %v368 = vld [vmem:[#allocation7 + $0x18] sm:$0xff]
    %v369 = vld [vmem:[#allocation7 + $0x20] sm:$0xff]
    %v370 = vld [vmem:[#allocation7 + $0x28] sm:$0xff]
    %v371 = vld [vmem:[#allocation7 + $0x30] sm:$0xff]
    %v372 = vld [vmem:[#allocation7 + $0x38] sm:$0xff]
    %v373 = vld [vmem:[#allocation7 + $0x40] sm:$0xff]
    %v374 = vld [vmem:[#allocation7 + $0x48] sm:$0xff]
    %v375 = vld [vmem:[#allocation7 + $0x50] sm:$0xff]
    %v376 = vld [vmem:[#allocation7 + $0x58] sm:$0xff]
    %v377 = vld [vmem:[#allocation7 + $0x60] sm:$0xff]
    %v378 = vld [vmem:[#allocation7 + $0x68] sm:$0xff]
    %v379 = vld [vmem:[#allocation7 + $0x70] sm:$0xff]
    %v380 = vld [vmem:[#allocation7 + $0x78] sm:$0xff]
    %381 = vmatprep.subr.mxu0 0.0
    %382 = vmatpush1.msra.mxu0 %v380
    %383 = vmatprep.subr.mxu0 0.0
    %384 = vmatpush1.msra.mxu0 %v379
    %385 = vmatprep.subr.mxu0 0.0
    %386 = vmatpush1.msra.mxu0 %v378
    %387 = vmatprep.subr.mxu0 0.0
    %388 = vmatpush1.msra.mxu0 %v377
    %389 = vmatprep.subr.mxu0 0.0
    %390 = vmatpush1.msra.mxu0 %v376
    %391 = vmatprep.subr.mxu0 0.0
    %392 = vmatpush1.msra.mxu0 %v375
    %393 = vmatprep.subr.mxu0 0.0
    %394 = vmatpush1.msra.mxu0 %v374
    %395 = vmatprep.subr.mxu0 0.0
    %396 = vmatpush1.msra.mxu0 %v373
    %397 = vmatprep.subr.mxu0 0.0
    %398 = vmatpush1.msra.mxu0 %v372
    %399 = vmatprep.subr.mxu0 0.0
    %400 = vmatpush1.msra.mxu0 %v371
    %401 = vmatprep.subr.mxu0 0.0
    %402 = vmatpush1.msra.mxu0 %v370
    %403 = vmatprep.subr.mxu0 0.0
    %404 = vmatpush1.msra.mxu0 %v369
    %405 = vmatprep.subr.mxu0 0.0
    %406 = vmatpush1.msra.mxu0 %v368
    %407 = vmatprep.subr.mxu0 0.0
    %408 = vmatpush1.msra.mxu0 %v367
    %409 = vmatprep.subr.mxu0 0.0
    %410 = vmatpush1.msra.mxu0 %v366
    %411 = vmatprep.subr.mxu0 0.0
    %412 = vmatpush1.msra.mxu0 %v365
    %413 = vmatprep.subr.mxu0 0.0
    %414 = vmatpush2.msra.mxu0 0.0
    %415 = vmatprep.subr.mxu0 0.0
    %416 = vmatpush2.msra.mxu0 0.0
    %417 = vmatprep.subr.mxu0 0.0
    %418 = vmatpush2.msra.mxu0 0.0
    %419 = vmatprep.subr.mxu0 0.0
    %420 = vmatpush2.msra.mxu0 0.0
    %421 = vmatprep.subr.mxu0 0.0
    %422 = vmatpush2.msra.mxu0 0.0
    %423 = vmatprep.subr.mxu0 0.0
    %424 = vmatpush2.msra.mxu0 0.0
    %425 = vmatprep.subr.mxu0 0.0
    %426 = vmatpush2.msra.mxu0 0.0
    %427 = vmatprep.subr.mxu0 0.0
    %428 = vmatpush2.msra.mxu0 0.0
    %429 = vmatprep.subr.mxu0 0.0
    %430 = vmatpush2.msra.mxu0 0.0
    %431 = vmatprep.subr.mxu0 0.0
    %432 = vmatpush2.msra.mxu0 0.0
    %433 = vmatprep.subr.mxu0 0.0
    %434 = vmatpush2.msra.mxu0 0.0
    %435 = vmatprep.subr.mxu0 0.0
    %436 = vmatpush2.msra.mxu0 0.0
    %437 = vmatprep.subr.mxu0 0.0
    %438 = vmatpush2.msra.mxu0 0.0
    %439 = vmatprep.subr.mxu0 0.0
    %440 = vmatpush2.msra.mxu0 0.0
    %441 = vmatprep.subr.mxu0 0.0
    %442 = vmatpush2.msra.mxu0 0.0
    %443 = vmatprep.subr.mxu0 0.0
    %444 = vmatpush2.msra.mxu0 0.0
    %445 = vmatprep.mubr.f32.mxu0 0.0
    %446 = vmatmul.mubr.f32.gmra.mxu0 %v261
    %v447 = vpop.f32.mrf.mxu0
    %v448 = vadd.f32 0.0, %v447
    %v449 = vpop.f32.mrf.mxu0
    %450 = vmatprep.mubr.f32.mxu0 0.0
    %451 = vmatmul.mubr.f32.gmra.mxu0 %v364
    %v452 = vpop.f32.mrf.mxu0
    %v453 = vadd.f32 0.0, %v452
    %v454 = vpop.f32.mrf.mxu0
    %455 = vdwg.mxu0
    %v456 = vmul.f32 %v448, 0.125
    %v457 = vmul.f32 %v453, 0.125
    %458 = vst [vmem:[#allocation8] sm:$0xff] %v456
    %459 = vst [vmem:[#allocation8 + $0x8] sm:$0xff] %v457
    // Predicated region
    $region30: #{tpu_custom_call.1} parent=1 // pred_check
      _
    $region31: #{tpu_custom_call.1} parent=1 // pred_check_branch
      %461 = sbr.rel (0) target = $region33
    $region32: #{tpu_custom_call.1} parent=1 // pred_region
      %s463 = ssub.s32 256, 256
      %464 = vsyncadd [#allocation4], %s463
      %s465 = sshll.u32 [#allocation8], 4
      %s466 = int_to_ptr.vmem [resolvable:$true] %s465
      %471 = dma.vmem_to_hbm [thread:$0]  %s466, 256, %s4, [#allocation4], 128, 128, 8
    $region33: #{tpu_custom_call.1} parent=1 // pred_fallthru
      _
    // Predicated region
    $region34: #{tpu_custom_call.1} parent=1 // pred_check
      _
    $region35: #{tpu_custom_call.1} parent=1 // pred_check_branch
      %473 = sbr.rel (0) target = $region37
    $region36: #{tpu_custom_call.1} parent=1 // pred_region
      %474 = dma.done [#allocation4], 256
    $region37: #{tpu_custom_call.1} parent=1 // pred_fallthru
      _
    %475 = vsyncpa [#allocation3], 1
    %476 = vsyncpa [#allocation6], 1
    %477 = vsyncpa [#allocation4], 1

</llo_original>
